<compile_context>
chip_gen: v6e
topology: v6e:2x2x1
jax: 0.10.0
libtpu: 0.0.40
codegen_flags: <defaults>
</compile_context>

<pallas_src>
import functools

import jax
import jax.numpy as jnp
import numpy as np
from jax.experimental import pallas as pl
from jax.experimental.pallas import tpu as pltpu

BN_EPS = 1e-5
LANE = 128      # pad all feature/channel (lane) dims to this
SUBLANE = 8     # pad graph count (sublane) to a multiple of this


def _fused_gcn_kernel(ahat_ref, x_ref, p_ref, w_ref, bias_ref, out_ref):
    """Whole forward pass on padded, lane-dense operands.

    w_ref is a packed [4, 128, 128] slab:
      slot 0: folded W1' (GCN1 @ BN1), slot 1: folded W2' (GCN2 @ BN2),
      slot 2: classifier Wc1,          slot 3: classifier Wc2.
    bias_ref is a packed [8, 128] slab:
      row 0: folded b1', row 1: folded b2', row 2: bc1, row 3: bc2.
    """
    ahat = ahat_ref[...]

    w1 = w_ref[0]
    w2 = w_ref[1]
    wc1 = w_ref[2]
    wc2 = w_ref[3]

    b1 = bias_ref[0:1, :]
    b2 = bias_ref[1:2, :]
    bc1 = bias_ref[2:3, :]
    bc2 = bias_ref[3:4, :]

    # ---- GCNConv 1 (+ folded BN1) + ReLU ----
    h = jnp.dot(x_ref[...], w1, preferred_element_type=jnp.float32)
    h = jnp.dot(ahat, h, preferred_element_type=jnp.float32) + b1
    h = jnp.maximum(h, 0.0)
    # Dropout (eval) == identity

    # ---- GCNConv 2 (+ folded BN2) + ReLU ----
    h = jnp.dot(h, w2, preferred_element_type=jnp.float32)
    h = jnp.dot(ahat, h, preferred_element_type=jnp.float32) + b2
    h = jnp.maximum(h, 0.0)
    # Dropout (eval) == identity

    # ---- global_mean_pool:  P @ H ----
    pooled = jnp.dot(p_ref[...], h, preferred_element_type=jnp.float32)

    # ---- Classifier: Linear -> ReLU -> (Dropout eval) -> Linear ----
    z = jnp.dot(pooled, wc1, preferred_element_type=jnp.float32) + bc1
    z = jnp.maximum(z, 0.0)
    out_ref[...] = (
        jnp.dot(z, wc2, preferred_element_type=jnp.float32) + bc2
    )


def _full_spec(shape):
    return pl.BlockSpec(shape, lambda i: (0,) * len(shape))


def _pad2(a, rows, cols):
    """Zero-pad a 2-D array up to (rows, cols)."""
    return jnp.zeros((rows, cols), a.dtype).at[: a.shape[0], : a.shape[1]].set(a)


def _round_up(x, m):
    return ((x + m - 1) // m) * m


@functools.partial(jax.jit, static_argnames=("num_graphs",))
def molecule_gcn_forward(params, x, edge_index, batch, num_graphs):
    """Dense-ify the graph, fold BN, pad lane-dense, run the fused kernel."""
    n, in_dim = x.shape
    out_dim = params["w1"].shape[1]
    hidden_dim = params["wc1"].shape[1]
    num_classes = params["wc2"].shape[1]

    n_pad = _round_up(n, LANE)           # N is a lane dim of Â / P -> pad to 128
    g_pad = _round_up(num_graphs, SUBLANE)

    # ---- Â = D^-1/2 (A + I) D^-1/2  (PyG gcn_norm), built on the real N ----
    adj = jnp.zeros((n, n), jnp.float32)
    adj = adj.at[edge_index[1], edge_index[0]].add(1.0)
    adj = adj + jnp.eye(n, dtype=jnp.float32)          # self loops
    deg = jnp.sum(adj, axis=1)
    dinv = jax.lax.rsqrt(jnp.maximum(deg, 1e-12))
    ahat = dinv[:, None] * adj * dinv[None, :]

    # ---- mean-pool matrix P[g, n] = 1/|graph g| for nodes of graph g ----
    one_hot = (batch[None, :] == jnp.arange(num_graphs)[:, None]).astype(jnp.float32)
    counts = jnp.maximum(jnp.sum(one_hot, axis=1, keepdims=True), 1.0)
    pool = one_hot / counts

    # ---- fold BatchNorm (eval) into GCN weights / biases ----
    s1 = params["bn1_g"] * jax.lax.rsqrt(params["bn1_v"] + BN_EPS)
    w1f = params["w1"] * s1[None, :]
    b1f = (params["b1"] - params["bn1_m"]) * s1 + params["bn1_b"]

    s2 = params["bn2_g"] * jax.lax.rsqrt(params["bn2_v"] + BN_EPS)
    w2f = params["w2"] * s2[None, :]
    b2f = (params["b2"] - params["bn2_m"]) * s2 + params["bn2_b"]

    # ---- pad everything lane-dense (zeros in padded lanes are exact) ----
    ahat_p = _pad2(ahat, n_pad, n_pad)                          # [Np, Np]
    x_p = _pad2(x, n_pad, LANE)                                 # [Np, 128]
    pool_p = _pad2(pool, g_pad, n_pad)                          # [Gp, Np]

    # pack all four (padded) weight matrices into one [4, 128, 128] slab
    weights = jnp.stack(
        [
            _pad2(w1f, LANE, LANE),
            _pad2(w2f, LANE, LANE),
            _pad2(params["wc1"], LANE, LANE),
            _pad2(params["wc2"], LANE, LANE),
        ],
        axis=0,
    )

    # pack all per-channel vectors into one [8, 128] slab (one DMA, one ref)
    biases = jnp.zeros((SUBLANE, LANE), jnp.float32)
    biases = biases.at[0, :out_dim].set(b1f)
    biases = biases.at[1, :out_dim].set(b2f)
    biases = biases.at[2, :hidden_dim].set(params["bc1"])
    biases = biases.at[3, :num_classes].set(params["bc2"])

    inputs = (ahat_p, x_p, pool_p, weights, biases)
    out_shape = jax.ShapeDtypeStruct((g_pad, LANE), jnp.float32)

    out_padded = pl.pallas_call(
        _fused_gcn_kernel,
        out_shape=out_shape,
        grid=(1,),
        in_specs=[_full_spec(a.shape) for a in inputs],
        out_specs=_full_spec((g_pad, LANE)),
        compiler_params=pltpu.CompilerParams(
            dimension_semantics=("arbitrary",),
            vmem_limit_bytes=32 * 1024 * 1024,
        ),
    )(*inputs)

    return out_padded[:num_graphs, :num_classes]


def _reference_forward(params, x, edge_index, batch, num_graphs):
    """Pure-JAX reference of the same (eval-mode) forward pass."""
    n = x.shape[0]
    adj = jnp.zeros((n, n), jnp.float32).at[edge_index[1], edge_index[0]].add(1.0)
    adj = adj + jnp.eye(n, dtype=jnp.float32)
    deg = jnp.sum(adj, axis=1)
    dinv = jax.lax.rsqrt(jnp.maximum(deg, 1e-12))
    ahat = dinv[:, None] * adj * dinv[None, :]

    def bn(h, g, b, m, v):
        return (h - m) * jax.lax.rsqrt(v + BN_EPS) * g + b

    h = ahat @ (x @ params["w1"]) + params["b1"]
    h = jnp.maximum(bn(h, params["bn1_g"], params["bn1_b"],
                       params["bn1_m"], params["bn1_v"]), 0.0)
    h = ahat @ (h @ params["w2"]) + params["b2"]
    h = jnp.maximum(bn(h, params["bn2_g"], params["bn2_b"],
                       params["bn2_m"], params["bn2_v"]), 0.0)

    one_hot = (batch[None, :] == jnp.arange(num_graphs)[:, None]).astype(jnp.float32)
    counts = jnp.maximum(jnp.sum(one_hot, axis=1, keepdims=True), 1.0)
    pooled = (one_hot / counts) @ h

    z = jnp.maximum(pooled @ params["wc1"] + params["bc1"], 0.0)
    return z @ params["wc2"] + params["bc2"]


def init_params(key, in_dim, hidden_dim, out_dim, num_classes):
    ks = jax.random.split(key, 8)

    def lin(k, fan_in, fan_out):
        bound = 1.0 / np.sqrt(fan_in)
        return jax.random.uniform(k, (fan_in, fan_out), jnp.float32, -bound, bound)

    return {
        "w1": lin(ks[0], in_dim, out_dim),
        "b1": jnp.zeros((out_dim,), jnp.float32),
        "bn1_g": jnp.ones((out_dim,), jnp.float32),
        "bn1_b": jnp.zeros((out_dim,), jnp.float32),
        "bn1_m": 0.1 * jax.random.normal(ks[6], (out_dim,), jnp.float32),
        "bn1_v": jnp.ones((out_dim,), jnp.float32) + 0.05,
        "w2": lin(ks[1], out_dim, out_dim),
        "b2": jnp.zeros((out_dim,), jnp.float32),
        "bn2_g": jnp.ones((out_dim,), jnp.float32),
        "bn2_b": jnp.zeros((out_dim,), jnp.float32),
        "bn2_m": 0.1 * jax.random.normal(ks[7], (out_dim,), jnp.float32),
        "bn2_v": jnp.ones((out_dim,), jnp.float32) + 0.05,
        "wc1": lin(ks[2], out_dim, hidden_dim),
        "bc1": jax.random.uniform(ks[3], (hidden_dim,), jnp.float32, -0.05, 0.05),
        "wc2": lin(ks[4], hidden_dim, num_classes),
        "bc2": jax.random.uniform(ks[5], (num_classes,), jnp.float32, -0.05, 0.05),
    }


if __name__ == "__main__":
    IN_DIM, HIDDEN_DIM, OUT_DIM, NUM_CLASSES = 8, 32, 16, 3
    N_NODES, N_EDGES, N_GRAPHS = 24, 48, 3

    key = jax.random.PRNGKey(0)
    kp, kx, ke = jax.random.split(key, 3)

    params = init_params(kp, IN_DIM, HIDDEN_DIM, OUT_DIM, NUM_CLASSES)

    x = jax.random.normal(kx, (N_NODES, IN_DIM), jnp.float32)
    edge_index = jax.random.randint(ke, (2, N_EDGES), 0, N_NODES, jnp.int32)
    batch = jnp.repeat(jnp.arange(N_GRAPHS, dtype=jnp.int32), N_NODES // N_GRAPHS)

    out = molecule_gcn_forward(params, x, edge_index, batch, N_GRAPHS)
    out = jax.block_until_ready(out)

    ref = _reference_forward(params, x, edge_index, batch, N_GRAPHS)
    np.testing.assert_allclose(np.asarray(out), np.asarray(ref), rtol=1e-5, atol=1e-5)

    print("KERNEL_OK")
</pallas_src>

<mosaic_0001>
module attributes {stable_mosaic.version = 11 : i64} {
  func.func private @main(%arg0: i32) attributes {dimension_semantics = [#tpu.dimension_semantics<core_parallel>], iteration_bounds = array<i64: 2>, tpu.core_type = #tpu.core_type<sc_scalar_subcore>, window_params = []} {
    return
  }
}

module attributes {stable_mosaic.version = 11 : i64} {
  func.func private @main(%arg0: i32) attributes {dimension_semantics = [#tpu.dimension_semantics<core_parallel>], iteration_bounds = array<i64: 2>, tpu.core_type = #tpu.core_type<sc_scalar_subcore>, window_params = []} {
    return
  }
}

module attributes {stable_mosaic.version = 11 : i64} {
  func.func @_fused_gcn_kernel(%arg0: i32, %arg1: memref<128x128xf32, #tpu.memory_space<vmem>>, %arg2: memref<128x128xf32, #tpu.memory_space<vmem>>, %arg3: memref<8x128xf32, #tpu.memory_space<vmem>>, %arg4: memref<4x128x128xf32, #tpu.memory_space<vmem>>, %arg5: memref<8x128xf32, #tpu.memory_space<vmem>>, %arg6: memref<8x128xf32, #tpu.memory_space<vmem>>) attributes {dimension_semantics = [#tpu.dimension_semantics<arbitrary>], iteration_bounds = array<i64: 1>, scalar_prefetch = 0 : i64, scratch_operands = 0 : i64, tpu.core_type = #tpu.core_type<tc>, window_params = [{pipeline_mode = #tpu.pipeline_mode<synchronous>, transform_indices = @transform_0, window_bounds = array<i64: 128, 128>}, {pipeline_mode = #tpu.pipeline_mode<synchronous>, transform_indices = @transform_1, window_bounds = array<i64: 128, 128>}, {pipeline_mode = #tpu.pipeline_mode<synchronous>, transform_indices = @transform_2, window_bounds = array<i64: 8, 128>}, {pipeline_mode = #tpu.pipeline_mode<synchronous>, transform_indices = @transform_3, window_bounds = array<i64: 4, 128, 128>}, {pipeline_mode = #tpu.pipeline_mode<synchronous>, transform_indices = @transform_4, window_bounds = array<i64: 8, 128>}, {pipeline_mode = #tpu.pipeline_mode<synchronous>, transform_indices = @transform_5, window_bounds = array<i64: 8, 128>}]} {
    %c0 = arith.constant 0 : index
    %c0_0 = arith.constant 0 : index
    %0 = vector.load %arg1[%c0, %c0_0] : memref<128x128xf32, #tpu.memory_space<vmem>>, vector<128x128xf32>
    %c0_1 = arith.constant 0 : index
    %c0_2 = arith.constant 0 : index
    %c0_3 = arith.constant 0 : index
    %1 = vector.load %arg4[%c0_1, %c0_2, %c0_3] : memref<4x128x128xf32, #tpu.memory_space<vmem>>, vector<1x128x128xf32>
    %2 = vector.shape_cast %1 : vector<1x128x128xf32> to vector<128x128xf32>
    %c1 = arith.constant 1 : index
    %c0_4 = arith.constant 0 : index
    %c0_5 = arith.constant 0 : index
    %3 = vector.load %arg4[%c1, %c0_4, %c0_5] : memref<4x128x128xf32, #tpu.memory_space<vmem>>, vector<1x128x128xf32>
    %4 = vector.shape_cast %3 : vector<1x128x128xf32> to vector<128x128xf32>
    %c2 = arith.constant 2 : index
    %c0_6 = arith.constant 0 : index
    %c0_7 = arith.constant 0 : index
    %5 = vector.load %arg4[%c2, %c0_6, %c0_7] : memref<4x128x128xf32, #tpu.memory_space<vmem>>, vector<1x128x128xf32>
    %6 = vector.shape_cast %5 : vector<1x128x128xf32> to vector<128x128xf32>
    %c3 = arith.constant 3 : index
    %c0_8 = arith.constant 0 : index
    %c0_9 = arith.constant 0 : index
    %7 = vector.load %arg4[%c3, %c0_8, %c0_9] : memref<4x128x128xf32, #tpu.memory_space<vmem>>, vector<1x128x128xf32>
    %8 = vector.shape_cast %7 : vector<1x128x128xf32> to vector<128x128xf32>
    %c0_10 = arith.constant 0 : index
    %c0_11 = arith.constant 0 : index
    %9 = vector.load %arg5[%c0_10, %c0_11] : memref<8x128xf32, #tpu.memory_space<vmem>>, vector<1x128xf32>
    %c1_12 = arith.constant 1 : index
    %c0_13 = arith.constant 0 : index
    %10 = vector.load %arg5[%c1_12, %c0_13] : memref<8x128xf32, #tpu.memory_space<vmem>>, vector<1x128xf32>
    %c2_14 = arith.constant 2 : index
    %c0_15 = arith.constant 0 : index
    %11 = vector.load %arg5[%c2_14, %c0_15] : memref<8x128xf32, #tpu.memory_space<vmem>>, vector<1x128xf32>
    %c3_16 = arith.constant 3 : index
    %c0_17 = arith.constant 0 : index
    %12 = vector.load %arg5[%c3_16, %c0_17] : memref<8x128xf32, #tpu.memory_space<vmem>>, vector<1x128xf32>
    %c0_18 = arith.constant 0 : index
    %c0_19 = arith.constant 0 : index
    %13 = vector.load %arg2[%c0_18, %c0_19] : memref<128x128xf32, #tpu.memory_space<vmem>>, vector<128x128xf32>
    %cst = arith.constant dense<0.000000e+00> : vector<128x128xf32>
    %14 = tpu.matmul %13, %2, %cst {dimension_numbers = #tpu.dot_dimension_numbers<[1], [0], [0], [1], [0, 0, 1, 1], [], []>} : vector<128x128xf32>, vector<128x128xf32>, vector<128x128xf32> -> vector<128x128xf32>
    %cst_20 = arith.constant dense<0.000000e+00> : vector<128x128xf32>
    %15 = tpu.matmul %0, %14, %cst_20 {dimension_numbers = #tpu.dot_dimension_numbers<[1], [0], [0], [1], [0, 0, 1, 1], [], []>} : vector<128x128xf32>, vector<128x128xf32>, vector<128x128xf32> -> vector<128x128xf32>
    %16 = vector.broadcast %9 : vector<1x128xf32> to vector<128x128xf32>
    %17 = arith.addf %15, %16 : vector<128x128xf32>
    %cst_21 = arith.constant 0.000000e+00 : f32
    %18 = vector.broadcast %cst_21 : f32 to vector<128x128xf32>
    %19 = arith.maximumf %17, %18 : vector<128x128xf32>
    %cst_22 = arith.constant dense<0.000000e+00> : vector<128x128xf32>
    %20 = tpu.matmul %19, %4, %cst_22 {dimension_numbers = #tpu.dot_dimension_numbers<[1], [0], [0], [1], [0, 0, 1, 1], [], []>} : vector<128x128xf32>, vector<128x128xf32>, vector<128x128xf32> -> vector<128x128xf32>
    %cst_23 = arith.constant dense<0.000000e+00> : vector<128x128xf32>
    %21 = tpu.matmul %0, %20, %cst_23 {dimension_numbers = #tpu.dot_dimension_numbers<[1], [0], [0], [1], [0, 0, 1, 1], [], []>} : vector<128x128xf32>, vector<128x128xf32>, vector<128x128xf32> -> vector<128x128xf32>
    %22 = vector.broadcast %10 : vector<1x128xf32> to vector<128x128xf32>
    %23 = arith.addf %21, %22 : vector<128x128xf32>
    %cst_24 = arith.constant 0.000000e+00 : f32
    %24 = vector.broadcast %cst_24 : f32 to vector<128x128xf32>
    %25 = arith.maximumf %23, %24 : vector<128x128xf32>
    %c0_25 = arith.constant 0 : index
    %c0_26 = arith.constant 0 : index
    %26 = vector.load %arg3[%c0_25, %c0_26] : memref<8x128xf32, #tpu.memory_space<vmem>>, vector<8x128xf32>
    %cst_27 = arith.constant dense<0.000000e+00> : vector<8x128xf32>
    %27 = tpu.matmul %26, %25, %cst_27 {dimension_numbers = #tpu.dot_dimension_numbers<[1], [0], [0], [1], [0, 0, 1, 1], [], []>} : vector<8x128xf32>, vector<128x128xf32>, vector<8x128xf32> -> vector<8x128xf32>
    %cst_28 = arith.constant dense<0.000000e+00> : vector<8x128xf32>
    %28 = tpu.matmul %27, %6, %cst_28 {dimension_numbers = #tpu.dot_dimension_numbers<[1], [0], [0], [1], [0, 0, 1, 1], [], []>} : vector<8x128xf32>, vector<128x128xf32>, vector<8x128xf32> -> vector<8x128xf32>
    %29 = vector.broadcast %11 : vector<1x128xf32> to vector<8x128xf32>
    %30 = arith.addf %28, %29 : vector<8x128xf32>
    %cst_29 = arith.constant 0.000000e+00 : f32
    %31 = vector.broadcast %cst_29 : f32 to vector<8x128xf32>
    %32 = arith.maximumf %30, %31 : vector<8x128xf32>
    %cst_30 = arith.constant dense<0.000000e+00> : vector<8x128xf32>
    %33 = tpu.matmul %32, %8, %cst_30 {dimension_numbers = #tpu.dot_dimension_numbers<[1], [0], [0], [1], [0, 0, 1, 1], [], []>} : vector<8x128xf32>, vector<128x128xf32>, vector<8x128xf32> -> vector<8x128xf32>
    %34 = vector.broadcast %12 : vector<1x128xf32> to vector<8x128xf32>
    %35 = arith.addf %33, %34 : vector<8x128xf32>
    %c0_31 = arith.constant 0 : index
    %c0_32 = arith.constant 0 : index
    %36 = vector.load %arg6[%c0_31, %c0_32] : memref<8x128xf32, #tpu.memory_space<vmem>>, vector<8x128xf32>
    tpu.vector_store %arg6[%c0_31, %c0_32], %35 {strides = array<i32>} : memref<8x128xf32, #tpu.memory_space<vmem>>, vector<8x128xf32>,
    return
  }
  func.func @transform_0(%arg0: i32) -> (i32, i32) {
    %c0_i32 = arith.constant 0 : i32
    %c0_i32_0 = arith.constant 0 : i32
    %c0_i32_1 = arith.constant 0 : i32
    return %c0_i32, %c0_i32_0 : i32, i32
  }
  func.func @transform_1(%arg0: i32) -> (i32, i32) {
    %c0_i32 = arith.constant 0 : i32
    %c0_i32_0 = arith.constant 0 : i32
    %c0_i32_1 = arith.constant 0 : i32
    return %c0_i32, %c0_i32_0 : i32, i32
  }
  func.func @transform_2(%arg0: i32) -> (i32, i32) {
    %c0_i32 = arith.constant 0 : i32
    %c0_i32_0 = arith.constant 0 : i32
    %c0_i32_1 = arith.constant 0 : i32
    return %c0_i32, %c0_i32_0 : i32, i32
  }
  func.func @transform_3(%arg0: i32) -> (i32, i32, i32) {
    %c0_i32 = arith.constant 0 : i32
    %c0_i32_0 = arith.constant 0 : i32
    %c0_i32_1 = arith.constant 0 : i32
    %c0_i32_2 = arith.constant 0 : i32
    return %c0_i32, %c0_i32_0, %c0_i32_1 : i32, i32, i32
  }
  func.func @transform_4(%arg0: i32) -> (i32, i32) {
    %c0_i32 = arith.constant 0 : i32
    %c0_i32_0 = arith.constant 0 : i32
    %c0_i32_1 = arith.constant 0 : i32
    return %c0_i32, %c0_i32_0 : i32, i32
  }
  func.func @transform_5(%arg0: i32) -> (i32, i32) {
    %c0_i32 = arith.constant 0 : i32
    %c0_i32_0 = arith.constant 0 : i32
    %c0_i32_1 = arith.constant 0 : i32
    return %c0_i32, %c0_i32_0 : i32, i32
  }
}

</mosaic_0001>

<llo_original>
// kernel: molecule_gcn_forward.1
$region0: #{molecule_gcn_forward.1}
  #allocation0 [shape = 'u32[]', space=smem, size = 0x4, offset = 0x4, fixed_abs, tag = 'smem constant byte address 0x4 - core index']
  #allocation1 [shape = 'u32[144,128]{1,0:T(1,128)}', space=vmem, size = 0x12000, scoped, tag = 'internal scratch']
  %s0 = inlined_call_operand.vmem [shape: f32[128,128], index: 0, kind: input, shape index: {}]
  %s1 = inlined_call_operand.vmem [shape: f32[128,128], index: 1, kind: input, shape index: {}]
  %s2 = inlined_call_operand.vmem [shape: f32[8,128], index: 2, kind: input, shape index: {}]
  %s3 = inlined_call_operand.vmem [shape: f32[4,128,128], index: 3, kind: input, shape index: {}]
  %s4 = inlined_call_operand.vmem [shape: f32[8,128], index: 4, kind: input, shape index: {}]
  %s5 = inlined_call_operand.vmem [shape: f32[8,128], index: 5, kind: output, shape index: {}]
  %s6 = sld [smem:[#allocation0]]
  $region30: #{molecule_gcn_forward.1} parent=0
    _
  %s8 = ssub.s32 1, %s6
  %s9 = scalar_select 0, %s8, %s6
  // Predicated region
  $region2: #{molecule_gcn_forward.1} parent=0 // pred_check
    _
  $region3: #{molecule_gcn_forward.1} parent=0 // pred_check_branch
    %11 = sbr.rel (0) target = $region5
  $region4: #{molecule_gcn_forward.1} parent=0 // pred_region
    _
  $region5: #{molecule_gcn_forward.1} parent=0 // pred_fallthru
    _
  // Predicated region
  $region6: #{molecule_gcn_forward.1} parent=0 // pred_check
    _
  $region7: #{molecule_gcn_forward.1} parent=0 // pred_check_branch
    %13 = sbr.rel (0) target = $region9
  $region8: #{molecule_gcn_forward.1} parent=0 // pred_region
    _
  $region9: #{molecule_gcn_forward.1} parent=0 // pred_fallthru
    _
  // Predicated region
  $region10: #{molecule_gcn_forward.1} parent=0 // pred_check
    _
  $region11: #{molecule_gcn_forward.1} parent=0 // pred_check_branch
    %15 = sbr.rel (0) target = $region13
  $region12: #{molecule_gcn_forward.1} parent=0 // pred_region
    _
  $region13: #{molecule_gcn_forward.1} parent=0 // pred_fallthru
    _
  // Predicated region
  $region14: #{molecule_gcn_forward.1} parent=0 // pred_check
    _
  $region15: #{molecule_gcn_forward.1} parent=0 // pred_check_branch
    %17 = sbr.rel (0) target = $region17
  $region16: #{molecule_gcn_forward.1} parent=0 // pred_region
    _
  $region17: #{molecule_gcn_forward.1} parent=0 // pred_fallthru
    _
  // Predicated region
  $region18: #{molecule_gcn_forward.1} parent=0 // pred_check
    _
  $region19: #{molecule_gcn_forward.1} parent=0 // pred_check_branch
    %19 = sbr.rel (0) target = $region21
  $region20: #{molecule_gcn_forward.1} parent=0 // pred_region
    _
  $region21: #{molecule_gcn_forward.1} parent=0 // pred_fallthru
    _
  %v20 = vld [vmem:[%s0] sm:$0xff]
  %v21 = vld [vmem:[%s0 + $0x8] sm:$0xff]
  %v22 = vld [vmem:[%s0 + $0x10] sm:$0xff]
  %v23 = vld [vmem:[%s0 + $0x18] sm:$0xff]
  %v24 = vld [vmem:[%s0 + $0x20] sm:$0xff]
  %v25 = vld [vmem:[%s0 + $0x28] sm:$0xff]
  %v26 = vld [vmem:[%s0 + $0x30] sm:$0xff]
  %v27 = vld [vmem:[%s0 + $0x38] sm:$0xff]
  %v28 = vld [vmem:[%s0 + $0x40] sm:$0xff]
  %v29 = vld [vmem:[%s0 + $0x48] sm:$0xff]
  %v30 = vld [vmem:[%s0 + $0x50] sm:$0xff]
  %v31 = vld [vmem:[%s0 + $0x58] sm:$0xff]
  %v32 = vld [vmem:[%s0 + $0x60] sm:$0xff]
  %v33 = vld [vmem:[%s0 + $0x68] sm:$0xff]
  %v34 = vld [vmem:[%s0 + $0x70] sm:$0xff]
  %v35 = vld [vmem:[%s0 + $0x78] sm:$0xff]
  %v36 = vld [vmem:[%s3] sm:$0xff]
  %v37 = vld [vmem:[%s3 + $0x8] sm:$0xff]
  %v38 = vld [vmem:[%s3 + $0x10] sm:$0xff]
  %v39 = vld [vmem:[%s3 + $0x18] sm:$0xff]
  %v40 = vld [vmem:[%s3 + $0x20] sm:$0xff]
  %v41 = vld [vmem:[%s3 + $0x28] sm:$0xff]
  %v42 = vld [vmem:[%s3 + $0x30] sm:$0xff]
  %v43 = vld [vmem:[%s3 + $0x38] sm:$0xff]
  %v44 = vld [vmem:[%s3 + $0x40] sm:$0xff]
  %v45 = vld [vmem:[%s3 + $0x48] sm:$0xff]
  %v46 = vld [vmem:[%s3 + $0x50] sm:$0xff]
  %v47 = vld [vmem:[%s3 + $0x58] sm:$0xff]
  %v48 = vld [vmem:[%s3 + $0x60] sm:$0xff]
  %v49 = vld [vmem:[%s3 + $0x68] sm:$0xff]
  %v50 = vld [vmem:[%s3 + $0x70] sm:$0xff]
  %v51 = vld [vmem:[%s3 + $0x78] sm:$0xff]
  %s52 = scalar_lea.vmem %s3, 128
  %v53 = vld [vmem:[%s52] sm:$0xff]
  %v54 = vld [vmem:[%s52 + $0x8] sm:$0xff]
  %v55 = vld [vmem:[%s52 + $0x10] sm:$0xff]
  %v56 = vld [vmem:[%s52 + $0x18] sm:$0xff]
  %v57 = vld [vmem:[%s52 + $0x20] sm:$0xff]
  %v58 = vld [vmem:[%s52 + $0x28] sm:$0xff]
  %v59 = vld [vmem:[%s52 + $0x30] sm:$0xff]
  %v60 = vld [vmem:[%s52 + $0x38] sm:$0xff]
  %v61 = vld [vmem:[%s52 + $0x40] sm:$0xff]
  %v62 = vld [vmem:[%s52 + $0x48] sm:$0xff]
  %v63 = vld [vmem:[%s52 + $0x50] sm:$0xff]
  %v64 = vld [vmem:[%s52 + $0x58] sm:$0xff]
  %v65 = vld [vmem:[%s52 + $0x60] sm:$0xff]
  %v66 = vld [vmem:[%s52 + $0x68] sm:$0xff]
  %v67 = vld [vmem:[%s52 + $0x70] sm:$0xff]
  %v68 = vld [vmem:[%s52 + $0x78] sm:$0xff]
  %s69 = scalar_lea.vmem %s3, 256
  %v70 = vld [vmem:[%s69] sm:$0xff]
  %v71 = vld [vmem:[%s69 + $0x8] sm:$0xff]
  %v72 = vld [vmem:[%s69 + $0x10] sm:$0xff]
  %v73 = vld [vmem:[%s69 + $0x18] sm:$0xff]
  %v74 = vld [vmem:[%s69 + $0x20] sm:$0xff]
  %v75 = vld [vmem:[%s69 + $0x28] sm:$0xff]
  %v76 = vld [vmem:[%s69 + $0x30] sm:$0xff]
  %v77 = vld [vmem:[%s69 + $0x38] sm:$0xff]
  %v78 = vld [vmem:[%s69 + $0x40] sm:$0xff]
  %v79 = vld [vmem:[%s69 + $0x48] sm:$0xff]
  %v80 = vld [vmem:[%s69 + $0x50] sm:$0xff]
  %v81 = vld [vmem:[%s69 + $0x58] sm:$0xff]
  %v82 = vld [vmem:[%s69 + $0x60] sm:$0xff]
  %v83 = vld [vmem:[%s69 + $0x68] sm:$0xff]
  %v84 = vld [vmem:[%s69 + $0x70] sm:$0xff]
  %v85 = vld [vmem:[%s69 + $0x78] sm:$0xff]
  %s86 = scalar_lea.vmem %s3, 384
  %v87 = vld [vmem:[%s86] sm:$0xff]
  %v88 = vld [vmem:[%s86 + $0x8] sm:$0xff]
  %v89 = vld [vmem:[%s86 + $0x10] sm:$0xff]
  %v90 = vld [vmem:[%s86 + $0x18] sm:$0xff]
  %v91 = vld [vmem:[%s86 + $0x20] sm:$0xff]
  %v92 = vld [vmem:[%s86 + $0x28] sm:$0xff]
  %v93 = vld [vmem:[%s86 + $0x30] sm:$0xff]
  %v94 = vld [vmem:[%s86 + $0x38] sm:$0xff]
  %v95 = vld [vmem:[%s86 + $0x40] sm:$0xff]
  %v96 = vld [vmem:[%s86 + $0x48] sm:$0xff]
  %v97 = vld [vmem:[%s86 + $0x50] sm:$0xff]
  %v98 = vld [vmem:[%s86 + $0x58] sm:$0xff]
  %v99 = vld [vmem:[%s86 + $0x60] sm:$0xff]
  %v100 = vld [vmem:[%s86 + $0x68] sm:$0xff]
  %v101 = vld [vmem:[%s86 + $0x70] sm:$0xff]
  %v102 = vld [vmem:[%s86 + $0x78] sm:$0xff]
  %v103 = vld [vmem:[%s4] sm:$0x1]
  %v104 = vld [vmem:[%s4 + $0x1] sm:$0x1]
  %v105 = vld [vmem:[%s4 + $0x2] sm:$0x1]
  %v106 = vld [vmem:[%s4 + $0x3] sm:$0x1]
  %v107 = vld [vmem:[%s1] sm:$0xff]
  %v108 = vld [vmem:[%s1 + $0x8] sm:$0xff]
  %v109 = vld [vmem:[%s1 + $0x10] sm:$0xff]
  %v110 = vld [vmem:[%s1 + $0x18] sm:$0xff]
  %v111 = vld [vmem:[%s1 + $0x20] sm:$0xff]
  %v112 = vld [vmem:[%s1 + $0x28] sm:$0xff]
  %v113 = vld [vmem:[%s1 + $0x30] sm:$0xff]
  %v114 = vld [vmem:[%s1 + $0x38] sm:$0xff]
  %v115 = vld [vmem:[%s1 + $0x40] sm:$0xff]
  %v116 = vld [vmem:[%s1 + $0x48] sm:$0xff]
  %v117 = vld [vmem:[%s1 + $0x50] sm:$0xff]
  %v118 = vld [vmem:[%s1 + $0x58] sm:$0xff]
  %v119 = vld [vmem:[%s1 + $0x60] sm:$0xff]
  %v120 = vld [vmem:[%s1 + $0x68] sm:$0xff]
  %v121 = vld [vmem:[%s1 + $0x70] sm:$0xff]
  %v122 = vld [vmem:[%s1 + $0x78] sm:$0xff]
  %123 = vmatprep.subr.mxu0 0.0
  %124 = vmatpush1.msra.mxu0 %v51
  %125 = vmatprep.subr.mxu0 0.0
  %126 = vmatpush1.msra.mxu0 %v50
  %127 = vmatprep.subr.mxu0 0.0
  %128 = vmatpush1.msra.mxu0 %v49
  %129 = vmatprep.subr.mxu0 0.0
  %130 = vmatpush1.msra.mxu0 %v48
  %131 = vmatprep.subr.mxu0 0.0
  %132 = vmatpush1.msra.mxu0 %v47
  %133 = vmatprep.subr.mxu0 0.0
  %134 = vmatpush1.msra.mxu0 %v46
  %135 = vmatprep.subr.mxu0 0.0
  %136 = vmatpush1.msra.mxu0 %v45
  %137 = vmatprep.subr.mxu0 0.0
  %138 = vmatpush1.msra.mxu0 %v44
  %139 = vmatprep.subr.mxu0 0.0
  %140 = vmatpush1.msra.mxu0 %v43
  %141 = vmatprep.subr.mxu0 0.0
  %142 = vmatpush1.msra.mxu0 %v42
  %143 = vmatprep.subr.mxu0 0.0
  %144 = vmatpush1.msra.mxu0 %v41
  %145 = vmatprep.subr.mxu0 0.0
  %146 = vmatpush1.msra.mxu0 %v40
  %147 = vmatprep.subr.mxu0 0.0
  %148 = vmatpush1.msra.mxu0 %v39
  %149 = vmatprep.subr.mxu0 0.0
  %150 = vmatpush1.msra.mxu0 %v38
  %151 = vmatprep.subr.mxu0 0.0
  %152 = vmatpush1.msra.mxu0 %v37
  %153 = vmatprep.subr.mxu0 0.0
  %154 = vmatpush1.msra.mxu0 %v36
  %155 = vmatprep.subr.mxu0 0.0
  %156 = vmatpush2.msra.mxu0 0.0
  %157 = vmatprep.subr.mxu0 0.0
  %158 = vmatpush2.msra.mxu0 0.0
  %159 = vmatprep.subr.mxu0 0.0
  %160 = vmatpush2.msra.mxu0 0.0
  %161 = vmatprep.subr.mxu0 0.0
  %162 = vmatpush2.msra.mxu0 0.0
  %163 = vmatprep.subr.mxu0 0.0
  %164 = vmatpush2.msra.mxu0 0.0
  %165 = vmatprep.subr.mxu0 0.0
  %166 = vmatpush2.msra.mxu0 0.0
  %167 = vmatprep.subr.mxu0 0.0
  %168 = vmatpush2.msra.mxu0 0.0
  %169 = vmatprep.subr.mxu0 0.0
  %170 = vmatpush2.msra.mxu0 0.0
  %171 = vmatprep.subr.mxu0 0.0
  %172 = vmatpush2.msra.mxu0 0.0
  %173 = vmatprep.subr.mxu0 0.0
  %174 = vmatpush2.msra.mxu0 0.0
  %175 = vmatprep.subr.mxu0 0.0
  %176 = vmatpush2.msra.mxu0 0.0
  %177 = vmatprep.subr.mxu0 0.0
  %178 = vmatpush2.msra.mxu0 0.0
  %179 = vmatprep.subr.mxu0 0.0
  %180 = vmatpush2.msra.mxu0 0.0
  %181 = vmatprep.subr.mxu0 0.0
  %182 = vmatpush2.msra.mxu0 0.0
  %183 = vmatprep.subr.mxu0 0.0
  %184 = vmatpush2.msra.mxu0 0.0
  %185 = vmatprep.subr.mxu0 0.0
  %186 = vmatpush2.msra.mxu0 0.0
  %187 = vmatprep.mubr.f32.mxu0 0.0
  %188 = vmatmul.mubr.f32.gmra.mxu0 %v107
  %v189 = vpop.f32.mrf.mxu0
  %v190 = vadd.f32 0.0, %v189
  %v191 = vpop.f32.mrf.mxu0
  %192 = vmatprep.mubr.f32.mxu0 0.0
  %193 = vmatmul.mubr.f32.gmra.mxu0 %v108
  %v194 = vpop.f32.mrf.mxu0
  %v195 = vadd.f32 0.0, %v194
  %v196 = vpop.f32.mrf.mxu0
  %197 = vmatprep.mubr.f32.mxu0 0.0
  %198 = vmatmul.mubr.f32.gmra.mxu0 %v109
  %v199 = vpop.f32.mrf.mxu0
  %v200 = vadd.f32 0.0, %v199
  %v201 = vpop.f32.mrf.mxu0
  %202 = vmatprep.mubr.f32.mxu0 0.0
  %203 = vmatmul.mubr.f32.gmra.mxu0 %v110
  %v204 = vpop.f32.mrf.mxu0
  %v205 = vadd.f32 0.0, %v204
  %v206 = vpop.f32.mrf.mxu0
  %207 = vmatprep.mubr.f32.mxu0 0.0
  %208 = vmatmul.mubr.f32.gmra.mxu0 %v111
  %v209 = vpop.f32.mrf.mxu0
  %v210 = vadd.f32 0.0, %v209
  %v211 = vpop.f32.mrf.mxu0
  %212 = vmatprep.mubr.f32.mxu0 0.0
  %213 = vmatmul.mubr.f32.gmra.mxu0 %v112
  %v214 = vpop.f32.mrf.mxu0
  %v215 = vadd.f32 0.0, %v214
  %v216 = vpop.f32.mrf.mxu0
  %217 = vmatprep.mubr.f32.mxu0 0.0
  %218 = vmatmul.mubr.f32.gmra.mxu0 %v113
  %v219 = vpop.f32.mrf.mxu0
  %v220 = vadd.f32 0.0, %v219
  %v221 = vpop.f32.mrf.mxu0
  %222 = vmatprep.mubr.f32.mxu0 0.0
  %223 = vmatmul.mubr.f32.gmra.mxu0 %v114
  %v224 = vpop.f32.mrf.mxu0
  %v225 = vadd.f32 0.0, %v224
  %v226 = vpop.f32.mrf.mxu0
  %227 = vmatprep.mubr.f32.mxu0 0.0
  %228 = vmatmul.mubr.f32.gmra.mxu0 %v115
  %v229 = vpop.f32.mrf.mxu0
  %v230 = vadd.f32 0.0, %v229
  %v231 = vpop.f32.mrf.mxu0
  %232 = vmatprep.mubr.f32.mxu0 0.0
  %233 = vmatmul.mubr.f32.gmra.mxu0 %v116
  %v234 = vpop.f32.mrf.mxu0
  %v235 = vadd.f32 0.0, %v234
  %v236 = vpop.f32.mrf.mxu0
  %237 = vmatprep.mubr.f32.mxu0 0.0
  %238 = vmatmul.mubr.f32.gmra.mxu0 %v117
  %v239 = vpop.f32.mrf.mxu0
  %v240 = vadd.f32 0.0, %v239
  %v241 = vpop.f32.mrf.mxu0
  %242 = vmatprep.mubr.f32.mxu0 0.0
  %243 = vmatmul.mubr.f32.gmra.mxu0 %v118
  %v244 = vpop.f32.mrf.mxu0
  %v245 = vadd.f32 0.0, %v244
  %v246 = vpop.f32.mrf.mxu0
  %247 = vmatprep.mubr.f32.mxu0 0.0
  %248 = vmatmul.mubr.f32.gmra.mxu0 %v119
  %v249 = vpop.f32.mrf.mxu0
  %v250 = vadd.f32 0.0, %v249
  %v251 = vpop.f32.mrf.mxu0
  %252 = vmatprep.mubr.f32.mxu0 0.0
  %253 = vmatmul.mubr.f32.gmra.mxu0 %v120
  %v254 = vpop.f32.mrf.mxu0
  %v255 = vadd.f32 0.0, %v254
  %v256 = vpop.f32.mrf.mxu0
  %257 = vmatprep.mubr.f32.mxu0 0.0
  %258 = vmatmul.mubr.f32.gmra.mxu0 %v121
  %v259 = vpop.f32.mrf.mxu0
  %v260 = vadd.f32 0.0, %v259
  %v261 = vpop.f32.mrf.mxu0
  %262 = vmatprep.mubr.f32.mxu0 0.0
  %263 = vmatmul.mubr.f32.gmra.mxu0 %v122
  %v264 = vpop.f32.mrf.mxu0
  %v265 = vadd.f32 0.0, %v264
  %v266 = vpop.f32.mrf.mxu0
  %267 = vdwg.mxu0
  %v268 = vlaneseq
  %v269 = vshrl.u32 %v268, 7
  %v270 = vsub.s32 0, %v269
  %v271 = vrot.slane %v103, %v270
  %272 = vmatprep.subr.mxu0 0.0
  %273 = vmatpush1.msra.mxu0 %v265
  %274 = vmatprep.subr.mxu0 0.0
  %275 = vmatpush1.msra.mxu0 %v260
  %276 = vmatprep.subr.mxu0 0.0
  %277 = vmatpush1.msra.mxu0 %v255
  %278 = vmatprep.subr.mxu0 0.0
  %279 = vmatpush1.msra.mxu0 %v250
  %280 = vmatprep.subr.mxu0 0.0
  %281 = vmatpush1.msra.mxu0 %v245
  %282 = vmatprep.subr.mxu0 0.0
  %283 = vmatpush1.msra.mxu0 %v240
  %284 = vmatprep.subr.mxu0 0.0
  %285 = vmatpush1.msra.mxu0 %v235
  %286 = vmatprep.subr.mxu0 0.0
  %287 = vmatpush1.msra.mxu0 %v230
  %288 = vmatprep.subr.mxu0 0.0
  %289 = vmatpush1.msra.mxu0 %v225
  %290 = vmatprep.subr.mxu0 0.0
  %291 = vmatpush1.msra.mxu0 %v220
  %292 = vmatprep.subr.mxu0 0.0
  %293 = vmatpush1.msra.mxu0 %v215
  %294 = vmatprep.subr.mxu0 0.0
  %295 = vmatpush1.msra.mxu0 %v210
  %296 = vmatprep.subr.mxu0 0.0
  %297 = vmatpush1.msra.mxu0 %v205
  %298 = vmatprep.subr.mxu0 0.0
  %299 = vmatpush1.msra.mxu0 %v200
  %300 = vmatprep.subr.mxu0 0.0
  %301 = vmatpush1.msra.mxu0 %v195
  %302 = vmatprep.subr.mxu0 0.0
  %303 = vmatpush1.msra.mxu0 %v190
  %304 = vmatprep.subr.mxu0 0.0
  %305 = vmatpush2.msra.mxu0 0.0
  %306 = vmatprep.subr.mxu0 0.0
  %307 = vmatpush2.msra.mxu0 0.0
  %308 = vmatprep.subr.mxu0 0.0
  %309 = vmatpush2.msra.mxu0 0.0
  %310 = vmatprep.subr.mxu0 0.0
  %311 = vmatpush2.msra.mxu0 0.0
  %312 = vmatprep.subr.mxu0 0.0
  %313 = vmatpush2.msra.mxu0 0.0
  %314 = vmatprep.subr.mxu0 0.0
  %315 = vmatpush2.msra.mxu0 0.0
  %316 = vmatprep.subr.mxu0 0.0
  %317 = vmatpush2.msra.mxu0 0.0
  %318 = vmatprep.subr.mxu0 0.0
  %319 = vmatpush2.msra.mxu0 0.0
  %320 = vmatprep.subr.mxu0 0.0
  %321 = vmatpush2.msra.mxu0 0.0
  %322 = vmatprep.subr.mxu0 0.0
  %323 = vmatpush2.msra.mxu0 0.0
  %324 = vmatprep.subr.mxu0 0.0
  %325 = vmatpush2.msra.mxu0 0.0
  %326 = vmatprep.subr.mxu0 0.0
  %327 = vmatpush2.msra.mxu0 0.0
  %328 = vmatprep.subr.mxu0 0.0
  %329 = vmatpush2.msra.mxu0 0.0
  %330 = vmatprep.subr.mxu0 0.0
  %331 = vmatpush2.msra.mxu0 0.0
  %332 = vmatprep.subr.mxu0 0.0
  %333 = vmatpush2.msra.mxu0 0.0
  %334 = vmatprep.subr.mxu0 0.0
  %335 = vmatpush2.msra.mxu0 0.0
  %336 = vmatprep.mubr.f32.mxu0 0.0
  %337 = vmatmul.mubr.f32.gmra.mxu0 %v20
  %v338 = vpop.f32.mrf.mxu0
  %v339 = vadd.f32 %v271, %v338
  %v340 = vpop.f32.mrf.mxu0
  %341 = vmatprep.mubr.f32.mxu0 0.0
  %342 = vmatmul.mubr.f32.gmra.mxu0 %v21
  %v343 = vpop.f32.mrf.mxu0
  %v344 = vadd.f32 %v271, %v343
  %v345 = vpop.f32.mrf.mxu0
  %346 = vmatprep.mubr.f32.mxu0 0.0
  %347 = vmatmul.mubr.f32.gmra.mxu0 %v22
  %v348 = vpop.f32.mrf.mxu0
  %v349 = vadd.f32 %v271, %v348
  %v350 = vpop.f32.mrf.mxu0
  %351 = vmatprep.mubr.f32.mxu0 0.0
  %352 = vmatmul.mubr.f32.gmra.mxu0 %v23
  %v353 = vpop.f32.mrf.mxu0
  %v354 = vadd.f32 %v271, %v353
  %v355 = vpop.f32.mrf.mxu0
  %356 = vmatprep.mubr.f32.mxu0 0.0
  %357 = vmatmul.mubr.f32.gmra.mxu0 %v24
  %v358 = vpop.f32.mrf.mxu0
  %v359 = vadd.f32 %v271, %v358
  %v360 = vpop.f32.mrf.mxu0
  %361 = vmatprep.mubr.f32.mxu0 0.0
  %362 = vmatmul.mubr.f32.gmra.mxu0 %v25
  %v363 = vpop.f32.mrf.mxu0
  %v364 = vadd.f32 %v271, %v363
  %v365 = vpop.f32.mrf.mxu0
  %366 = vmatprep.mubr.f32.mxu0 0.0
  %367 = vmatmul.mubr.f32.gmra.mxu0 %v26
  %v368 = vpop.f32.mrf.mxu0
  %v369 = vadd.f32 %v271, %v368
  %v370 = vpop.f32.mrf.mxu0
  %371 = vmatprep.mubr.f32.mxu0 0.0
  %372 = vmatmul.mubr.f32.gmra.mxu0 %v27
  %v373 = vpop.f32.mrf.mxu0
  %v374 = vadd.f32 %v271, %v373
  %v375 = vpop.f32.mrf.mxu0
  %376 = vmatprep.mubr.f32.mxu0 0.0
  %377 = vmatmul.mubr.f32.gmra.mxu0 %v28
  %v378 = vpop.f32.mrf.mxu0
  %v379 = vadd.f32 %v271, %v378
  %v380 = vpop.f32.mrf.mxu0
  %381 = vmatprep.mubr.f32.mxu0 0.0
  %382 = vmatmul.mubr.f32.gmra.mxu0 %v29
  %v383 = vpop.f32.mrf.mxu0
  %v384 = vadd.f32 %v271, %v383
  %v385 = vpop.f32.mrf.mxu0
  %386 = vmatprep.mubr.f32.mxu0 0.0
  %387 = vmatmul.mubr.f32.gmra.mxu0 %v30
  %v388 = vpop.f32.mrf.mxu0
  %v389 = vadd.f32 %v271, %v388
  %v390 = vpop.f32.mrf.mxu0
  %391 = vmatprep.mubr.f32.mxu0 0.0
  %392 = vmatmul.mubr.f32.gmra.mxu0 %v31
  %v393 = vpop.f32.mrf.mxu0
  %v394 = vadd.f32 %v271, %v393
  %v395 = vpop.f32.mrf.mxu0
  %396 = vmatprep.mubr.f32.mxu0 0.0
  %397 = vmatmul.mubr.f32.gmra.mxu0 %v32
  %v398 = vpop.f32.mrf.mxu0
  %v399 = vadd.f32 %v271, %v398
  %v400 = vpop.f32.mrf.mxu0
  %401 = vmatprep.mubr.f32.mxu0 0.0
  %402 = vmatmul.mubr.f32.gmra.mxu0 %v33
  %v403 = vpop.f32.mrf.mxu0
  %v404 = vadd.f32 %v271, %v403
  %v405 = vpop.f32.mrf.mxu0
  %406 = vmatprep.mubr.f32.mxu0 0.0
  %407 = vmatmul.mubr.f32.gmra.mxu0 %v34
  %v408 = vpop.f32.mrf.mxu0
  %v409 = vadd.f32 %v271, %v408
  %v410 = vpop.f32.mrf.mxu0
  %411 = vmatprep.mubr.f32.mxu0 0.0
  %412 = vmatmul.mubr.f32.gmra.mxu0 %v35
  %v413 = vpop.f32.mrf.mxu0
  %v414 = vadd.f32 %v271, %v413
  %v415 = vpop.f32.mrf.mxu0
  %416 = vdwg.mxu0
  %v417 = vmax.f32 %v339, 0.0
  %v418 = vmax.f32 %v344, 0.0
  %v419 = vmax.f32 %v349, 0.0
  %v420 = vmax.f32 %v354, 0.0
  %v421 = vmax.f32 %v359, 0.0
  %v422 = vmax.f32 %v364, 0.0
  %v423 = vmax.f32 %v369, 0.0
  %v424 = vmax.f32 %v374, 0.0
  %v425 = vmax.f32 %v379, 0.0
  %v426 = vmax.f32 %v384, 0.0
  %v427 = vmax.f32 %v389, 0.0
  %v428 = vmax.f32 %v394, 0.0
  %v429 = vmax.f32 %v399, 0.0
  %v430 = vmax.f32 %v404, 0.0
  %v431 = vmax.f32 %v409, 0.0
  %v432 = vmax.f32 %v414, 0.0
  %433 = vmatprep.subr.mxu0 0.0
  %434 = vmatpush1.msra.mxu0 %v68
  %435 = vmatprep.subr.mxu0 0.0
  %436 = vmatpush1.msra.mxu0 %v67
  %437 = vmatprep.subr.mxu0 0.0
  %438 = vmatpush1.msra.mxu0 %v66
  %439 = vmatprep.subr.mxu0 0.0
  %440 = vmatpush1.msra.mxu0 %v65
  %441 = vmatprep.subr.mxu0 0.0
  %442 = vmatpush1.msra.mxu0 %v64
  %443 = vmatprep.subr.mxu0 0.0
  %444 = vmatpush1.msra.mxu0 %v63
  %445 = vmatprep.subr.mxu0 0.0
  %446 = vmatpush1.msra.mxu0 %v62
  %447 = vmatprep.subr.mxu0 0.0
  %448 = vmatpush1.msra.mxu0 %v61
  %449 = vmatprep.subr.mxu0 0.0
  %450 = vmatpush1.msra.mxu0 %v60
  %451 = vmatprep.subr.mxu0 0.0
  %452 = vmatpush1.msra.mxu0 %v59
  %453 = vmatprep.subr.mxu0 0.0
  %454 = vmatpush1.msra.mxu0 %v58
  %455 = vmatprep.subr.mxu0 0.0
  %456 = vmatpush1.msra.mxu0 %v57
  %457 = vmatprep.subr.mxu0 0.0
  %458 = vmatpush1.msra.mxu0 %v56
  %459 = vmatprep.subr.mxu0 0.0
  %460 = vmatpush1.msra.mxu0 %v55
  %461 = vmatprep.subr.mxu0 0.0
  %462 = vmatpush1.msra.mxu0 %v54
  %463 = vmatprep.subr.mxu0 0.0
  %464 = vmatpush1.msra.mxu0 %v53
  %465 = vmatprep.subr.mxu0 0.0
  %466 = vmatpush2.msra.mxu0 0.0
  %467 = vmatprep.subr.mxu0 0.0
  %468 = vmatpush2.msra.mxu0 0.0
  %469 = vmatprep.subr.mxu0 0.0
  %470 = vmatpush2.msra.mxu0 0.0
  %471 = vmatprep.subr.mxu0 0.0
  %472 = vmatpush2.msra.mxu0 0.0
  %473 = vmatprep.subr.mxu0 0.0
  %474 = vmatpush2.msra.mxu0 0.0
  %475 = vmatprep.subr.mxu0 0.0
  %476 = vmatpush2.msra.mxu0 0.0
  %477 = vmatprep.subr.mxu0 0.0
  %478 = vmatpush2.msra.mxu0 0.0
  %479 = vmatprep.subr.mxu0 0.0
  %480 = vmatpush2.msra.mxu0 0.0
  %481 = vmatprep.subr.mxu0 0.0
  %482 = vmatpush2.msra.mxu0 0.0
  %483 = vmatprep.subr.mxu0 0.0
  %484 = vmatpush2.msra.mxu0 0.0
  %485 = vmatprep.subr.mxu0 0.0
  %486 = vmatpush2.msra.mxu0 0.0
  %487 = vmatprep.subr.mxu0 0.0
  %488 = vmatpush2.msra.mxu0 0.0
  %489 = vmatprep.subr.mxu0 0.0
  %490 = vmatpush2.msra.mxu0 0.0
  %491 = vmatprep.subr.mxu0 0.0
  %492 = vmatpush2.msra.mxu0 0.0
  %493 = vmatprep.subr.mxu0 0.0
  %494 = vmatpush2.msra.mxu0 0.0
  %495 = vmatprep.subr.mxu0 0.0
  %496 = vmatpush2.msra.mxu0 0.0
  %497 = vmatprep.mubr.f32.mxu0 0.0
  %498 = vmatmul.mubr.f32.gmra.mxu0 %v417
  %v499 = vpop.f32.mrf.mxu0
  %v500 = vadd.f32 0.0, %v499
  %v501 = vpop.f32.mrf.mxu0
  %502 = vmatprep.mubr.f32.mxu0 0.0
  %503 = vmatmul.mubr.f32.gmra.mxu0 %v418
  %v504 = vpop.f32.mrf.mxu0
  %v505 = vadd.f32 0.0, %v504
  %v506 = vpop.f32.mrf.mxu0
  %507 = vmatprep.mubr.f32.mxu0 0.0
  %508 = vmatmul.mubr.f32.gmra.mxu0 %v419
  %v509 = vpop.f32.mrf.mxu0
  %v510 = vadd.f32 0.0, %v509
  %v511 = vpop.f32.mrf.mxu0
  %512 = vmatprep.mubr.f32.mxu0 0.0
  %513 = vmatmul.mubr.f32.gmra.mxu0 %v420
  %v514 = vpop.f32.mrf.mxu0
  %v515 = vadd.f32 0.0, %v514
  %v516 = vpop.f32.mrf.mxu0
  %517 = vmatprep.mubr.f32.mxu0 0.0
  %518 = vmatmul.mubr.f32.gmra.mxu0 %v421
  %v519 = vpop.f32.mrf.mxu0
  %v520 = vadd.f32 0.0, %v519
  %v521 = vpop.f32.mrf.mxu0
  %522 = vmatprep.mubr.f32.mxu0 0.0
  %523 = vmatmul.mubr.f32.gmra.mxu0 %v422
  %v524 = vpop.f32.mrf.mxu0
  %v525 = vadd.f32 0.0, %v524
  %v526 = vpop.f32.mrf.mxu0
  %527 = vmatprep.mubr.f32.mxu0 0.0
  %528 = vmatmul.mubr.f32.gmra.mxu0 %v423
  %v529 = vpop.f32.mrf.mxu0
  %v530 = vadd.f32 0.0, %v529
  %v531 = vpop.f32.mrf.mxu0
  %532 = vmatprep.mubr.f32.mxu0 0.0
  %533 = vmatmul.mubr.f32.gmra.mxu0 %v424
  %v534 = vpop.f32.mrf.mxu0
  %v535 = vadd.f32 0.0, %v534
  %v536 = vpop.f32.mrf.mxu0
  %537 = vmatprep.mubr.f32.mxu0 0.0
  %538 = vmatmul.mubr.f32.gmra.mxu0 %v425
  %v539 = vpop.f32.mrf.mxu0
  %v540 = vadd.f32 0.0, %v539
  %v541 = vpop.f32.mrf.mxu0
  %542 = vmatprep.mubr.f32.mxu0 0.0
  %543 = vmatmul.mubr.f32.gmra.mxu0 %v426
  %v544 = vpop.f32.mrf.mxu0
  %v545 = vadd.f32 0.0, %v544
  %v546 = vpop.f32.mrf.mxu0
  %547 = vmatprep.mubr.f32.mxu0 0.0
  %548 = vmatmul.mubr.f32.gmra.mxu0 %v427
  %v549 = vpop.f32.mrf.mxu0
  %v550 = vadd.f32 0.0, %v549
  %v551 = vpop.f32.mrf.mxu0
  %552 = vmatprep.mubr.f32.mxu0 0.0
  %553 = vmatmul.mubr.f32.gmra.mxu0 %v428
  %v554 = vpop.f32.mrf.mxu0
  %v555 = vadd.f32 0.0, %v554
  %v556 = vpop.f32.mrf.mxu0
  %557 = vmatprep.mubr.f32.mxu0 0.0
  %558 = vmatmul.mubr.f32.gmra.mxu0 %v429
  %v559 = vpop.f32.mrf.mxu0
  %v560 = vadd.f32 0.0, %v559
  %v561 = vpop.f32.mrf.mxu0
  %562 = vmatprep.mubr.f32.mxu0 0.0
  %563 = vmatmul.mubr.f32.gmra.mxu0 %v430
  %v564 = vpop.f32.mrf.mxu0
  %v565 = vadd.f32 0.0, %v564
  %v566 = vpop.f32.mrf.mxu0
  %567 = vmatprep.mubr.f32.mxu0 0.0
  %568 = vmatmul.mubr.f32.gmra.mxu0 %v431
  %v569 = vpop.f32.mrf.mxu0
  %v570 = vadd.f32 0.0, %v569
  %v571 = vpop.f32.mrf.mxu0
  %572 = vmatprep.mubr.f32.mxu0 0.0
  %573 = vmatmul.mubr.f32.gmra.mxu0 %v432
  %v574 = vpop.f32.mrf.mxu0
  %v575 = vadd.f32 0.0, %v574
  %v576 = vpop.f32.mrf.mxu0
  %577 = vdwg.mxu0
  %v578 = vlaneseq
  %v579 = vshrl.u32 %v578, 7
  %v580 = vsub.s32 0, %v579
  %v581 = vrot.slane %v104, %v580
  %582 = vmatprep.subr.mxu0 0.0
  %583 = vmatpush1.msra.mxu0 %v575
  %584 = vmatprep.subr.mxu0 0.0
  %585 = vmatpush1.msra.mxu0 %v570
  %586 = vmatprep.subr.mxu0 0.0
  %587 = vmatpush1.msra.mxu0 %v565
  %588 = vmatprep.subr.mxu0 0.0
  %589 = vmatpush1.msra.mxu0 %v560
  %590 = vmatprep.subr.mxu0 0.0
  %591 = vmatpush1.msra.mxu0 %v555
  %592 = vmatprep.subr.mxu0 0.0
  %593 = vmatpush1.msra.mxu0 %v550
  %594 = vmatprep.subr.mxu0 0.0
  %595 = vmatpush1.msra.mxu0 %v545
  %596 = vmatprep.subr.mxu0 0.0
  %597 = vmatpush1.msra.mxu0 %v540
  %598 = vmatprep.subr.mxu0 0.0
  %599 = vmatpush1.msra.mxu0 %v535
  %600 = vmatprep.subr.mxu0 0.0
  %601 = vmatpush1.msra.mxu0 %v530
  %602 = vmatprep.subr.mxu0 0.0
  %603 = vmatpush1.msra.mxu0 %v525
  %604 = vmatprep.subr.mxu0 0.0
  %605 = vmatpush1.msra.mxu0 %v520
  %606 = vmatprep.subr.mxu0 0.0
  %607 = vmatpush1.msra.mxu0 %v515
  %608 = vmatprep.subr.mxu0 0.0
  %609 = vmatpush1.msra.mxu0 %v510
  %610 = vmatprep.subr.mxu0 0.0
  %611 = vmatpush1.msra.mxu0 %v505
  %612 = vmatprep.subr.mxu0 0.0
  %613 = vmatpush1.msra.mxu0 %v500
  %614 = vmatprep.subr.mxu0 0.0
  %615 = vmatpush2.msra.mxu0 0.0
  %616 = vmatprep.subr.mxu0 0.0
  %617 = vmatpush2.msra.mxu0 0.0
  %618 = vmatprep.subr.mxu0 0.0
  %619 = vmatpush2.msra.mxu0 0.0
  %620 = vmatprep.subr.mxu0 0.0
  %621 = vmatpush2.msra.mxu0 0.0
  %622 = vmatprep.subr.mxu0 0.0
  %623 = vmatpush2.msra.mxu0 0.0
  %624 = vmatprep.subr.mxu0 0.0
  %625 = vmatpush2.msra.mxu0 0.0
  %626 = vmatprep.subr.mxu0 0.0
  %627 = vmatpush2.msra.mxu0 0.0
  %628 = vmatprep.subr.mxu0 0.0
  %629 = vmatpush2.msra.mxu0 0.0
  %630 = vmatprep.subr.mxu0 0.0
  %631 = vmatpush2.msra.mxu0 0.0
  %632 = vmatprep.subr.mxu0 0.0
  %633 = vmatpush2.msra.mxu0 0.0
  %634 = vmatprep.subr.mxu0 0.0
  %635 = vmatpush2.msra.mxu0 0.0
  %636 = vmatprep.subr.mxu0 0.0
  %637 = vmatpush2.msra.mxu0 0.0
  %638 = vmatprep.subr.mxu0 0.0
  %639 = vmatpush2.msra.mxu0 0.0
  %640 = vmatprep.subr.mxu0 0.0
  %641 = vmatpush2.msra.mxu0 0.0
  %642 = vmatprep.subr.mxu0 0.0
  %643 = vmatpush2.msra.mxu0 0.0
  %644 = vmatprep.subr.mxu0 0.0
  %645 = vmatpush2.msra.mxu0 0.0
  %646 = vmatprep.mubr.f32.mxu0 0.0
  %647 = vmatmul.mubr.f32.gmra.mxu0 %v20
  %v648 = vpop.f32.mrf.mxu0
  %v649 = vadd.f32 %v581, %v648
  %v650 = vpop.f32.mrf.mxu0
  %651 = vmatprep.mubr.f32.mxu0 0.0
  %652 = vmatmul.mubr.f32.gmra.mxu0 %v21
  %v653 = vpop.f32.mrf.mxu0
  %v654 = vadd.f32 %v581, %v653
  %v655 = vpop.f32.mrf.mxu0
  %656 = vmatprep.mubr.f32.mxu0 0.0
  %657 = vmatmul.mubr.f32.gmra.mxu0 %v22
  %v658 = vpop.f32.mrf.mxu0
  %v659 = vadd.f32 %v581, %v658
  %v660 = vpop.f32.mrf.mxu0
  %661 = vmatprep.mubr.f32.mxu0 0.0
  %662 = vmatmul.mubr.f32.gmra.mxu0 %v23
  %v663 = vpop.f32.mrf.mxu0
  %v664 = vadd.f32 %v581, %v663
  %v665 = vpop.f32.mrf.mxu0
  %666 = vmatprep.mubr.f32.mxu0 0.0
  %667 = vmatmul.mubr.f32.gmra.mxu0 %v24
  %v668 = vpop.f32.mrf.mxu0
  %v669 = vadd.f32 %v581, %v668
  %v670 = vpop.f32.mrf.mxu0
  %671 = vmatprep.mubr.f32.mxu0 0.0
  %672 = vmatmul.mubr.f32.gmra.mxu0 %v25
  %v673 = vpop.f32.mrf.mxu0
  %v674 = vadd.f32 %v581, %v673
  %v675 = vpop.f32.mrf.mxu0
  %676 = vmatprep.mubr.f32.mxu0 0.0
  %677 = vmatmul.mubr.f32.gmra.mxu0 %v26
  %v678 = vpop.f32.mrf.mxu0
  %v679 = vadd.f32 %v581, %v678
  %v680 = vpop.f32.mrf.mxu0
  %681 = vmatprep.mubr.f32.mxu0 0.0
  %682 = vmatmul.mubr.f32.gmra.mxu0 %v27
  %v683 = vpop.f32.mrf.mxu0
  %v684 = vadd.f32 %v581, %v683
  %v685 = vpop.f32.mrf.mxu0
  %686 = vmatprep.mubr.f32.mxu0 0.0
  %687 = vmatmul.mubr.f32.gmra.mxu0 %v28
  %v688 = vpop.f32.mrf.mxu0
  %v689 = vadd.f32 %v581, %v688
  %v690 = vpop.f32.mrf.mxu0
  %691 = vmatprep.mubr.f32.mxu0 0.0
  %692 = vmatmul.mubr.f32.gmra.mxu0 %v29
  %v693 = vpop.f32.mrf.mxu0
  %v694 = vadd.f32 %v581, %v693
  %v695 = vpop.f32.mrf.mxu0
  %696 = vmatprep.mubr.f32.mxu0 0.0
  %697 = vmatmul.mubr.f32.gmra.mxu0 %v30
  %v698 = vpop.f32.mrf.mxu0
  %v699 = vadd.f32 %v581, %v698
  %v700 = vpop.f32.mrf.mxu0
  %701 = vmatprep.mubr.f32.mxu0 0.0
  %702 = vmatmul.mubr.f32.gmra.mxu0 %v31
  %v703 = vpop.f32.mrf.mxu0
  %v704 = vadd.f32 %v581, %v703
  %v705 = vpop.f32.mrf.mxu0
  %706 = vmatprep.mubr.f32.mxu0 0.0
  %707 = vmatmul.mubr.f32.gmra.mxu0 %v32
  %v708 = vpop.f32.mrf.mxu0
  %v709 = vadd.f32 %v581, %v708
  %v710 = vpop.f32.mrf.mxu0
  %711 = vmatprep.mubr.f32.mxu0 0.0
  %712 = vmatmul.mubr.f32.gmra.mxu0 %v33
  %v713 = vpop.f32.mrf.mxu0
  %v714 = vadd.f32 %v581, %v713
  %v715 = vpop.f32.mrf.mxu0
  %716 = vmatprep.mubr.f32.mxu0 0.0
  %717 = vmatmul.mubr.f32.gmra.mxu0 %v34
  %v718 = vpop.f32.mrf.mxu0
  %v719 = vadd.f32 %v581, %v718
  %v720 = vpop.f32.mrf.mxu0
  %721 = vmatprep.mubr.f32.mxu0 0.0
  %722 = vmatmul.mubr.f32.gmra.mxu0 %v35
  %v723 = vpop.f32.mrf.mxu0
  %v724 = vadd.f32 %v581, %v723
  %v725 = vpop.f32.mrf.mxu0
  %726 = vdwg.mxu0
  %v727 = vmax.f32 %v649, 0.0
  %v728 = vmax.f32 %v654, 0.0
  %v729 = vmax.f32 %v659, 0.0
  %v730 = vmax.f32 %v664, 0.0
  %v731 = vmax.f32 %v669, 0.0
  %v732 = vmax.f32 %v674, 0.0
  %v733 = vmax.f32 %v679, 0.0
  %v734 = vmax.f32 %v684, 0.0
  %v735 = vmax.f32 %v689, 0.0
  %v736 = vmax.f32 %v694, 0.0
  %v737 = vmax.f32 %v699, 0.0
  %v738 = vmax.f32 %v704, 0.0
  %v739 = vmax.f32 %v709, 0.0
  %v740 = vmax.f32 %v714, 0.0
  %v741 = vmax.f32 %v719, 0.0
  %v742 = vmax.f32 %v724, 0.0
  %v743 = vld [vmem:[%s2] sm:$0xff]
  %744 = vmatprep.subr.mxu0 0.0
  %745 = vmatpush1.msra.mxu0 %v742
  %746 = vmatprep.subr.mxu0 0.0
  %747 = vmatpush1.msra.mxu0 %v741
  %748 = vmatprep.subr.mxu0 0.0
  %749 = vmatpush1.msra.mxu0 %v740
  %750 = vmatprep.subr.mxu0 0.0
  %751 = vmatpush1.msra.mxu0 %v739
  %752 = vmatprep.subr.mxu0 0.0
  %753 = vmatpush1.msra.mxu0 %v738
  %754 = vmatprep.subr.mxu0 0.0
  %755 = vmatpush1.msra.mxu0 %v737
  %756 = vmatprep.subr.mxu0 0.0
  %757 = vmatpush1.msra.mxu0 %v736
  %758 = vmatprep.subr.mxu0 0.0
  %759 = vmatpush1.msra.mxu0 %v735
  %760 = vmatprep.subr.mxu0 0.0
  %761 = vmatpush1.msra.mxu0 %v734
  %762 = vmatprep.subr.mxu0 0.0
  %763 = vmatpush1.msra.mxu0 %v733
  %764 = vmatprep.subr.mxu0 0.0
  %765 = vmatpush1.msra.mxu0 %v732
  %766 = vmatprep.subr.mxu0 0.0
  %767 = vmatpush1.msra.mxu0 %v731
  %768 = vmatprep.subr.mxu0 0.0
  %769 = vmatpush1.msra.mxu0 %v730
  %770 = vmatprep.subr.mxu0 0.0
  %771 = vmatpush1.msra.mxu0 %v729
  %772 = vmatprep.subr.mxu0 0.0
  %773 = vmatpush1.msra.mxu0 %v728
  %774 = vmatprep.subr.mxu0 0.0
  %775 = vmatpush1.msra.mxu0 %v727
  %776 = vmatprep.subr.mxu0 0.0
  %777 = vmatpush2.msra.mxu0 0.0
  %778 = vmatprep.subr.mxu0 0.0
  %779 = vmatpush2.msra.mxu0 0.0
  %780 = vmatprep.subr.mxu0 0.0
  %781 = vmatpush2.msra.mxu0 0.0
  %782 = vmatprep.subr.mxu0 0.0
  %783 = vmatpush2.msra.mxu0 0.0
  %784 = vmatprep.subr.mxu0 0.0
  %785 = vmatpush2.msra.mxu0 0.0
  %786 = vmatprep.subr.mxu0 0.0
  %787 = vmatpush2.msra.mxu0 0.0
  %788 = vmatprep.subr.mxu0 0.0
  %789 = vmatpush2.msra.mxu0 0.0
  %790 = vmatprep.subr.mxu0 0.0
  %791 = vmatpush2.msra.mxu0 0.0
  %792 = vmatprep.subr.mxu0 0.0
  %793 = vmatpush2.msra.mxu0 0.0
  %794 = vmatprep.subr.mxu0 0.0
  %795 = vmatpush2.msra.mxu0 0.0
  %796 = vmatprep.subr.mxu0 0.0
  %797 = vmatpush2.msra.mxu0 0.0
  %798 = vmatprep.subr.mxu0 0.0
  %799 = vmatpush2.msra.mxu0 0.0
  %800 = vmatprep.subr.mxu0 0.0
  %801 = vmatpush2.msra.mxu0 0.0
  %802 = vmatprep.subr.mxu0 0.0
  %803 = vmatpush2.msra.mxu0 0.0
  %804 = vmatprep.subr.mxu0 0.0
  %805 = vmatpush2.msra.mxu0 0.0
  %806 = vmatprep.subr.mxu0 0.0
  %807 = vmatpush2.msra.mxu0 0.0
  %808 = vmatprep.mubr.f32.mxu0 0.0
  %809 = vmatmul.mubr.f32.gmra.mxu0 %v743
  %v810 = vpop.f32.mrf.mxu0
  %v811 = vadd.f32 0.0, %v810
  %v812 = vpop.f32.mrf.mxu0
  %813 = vdwg.mxu0
  %v814 = vlaneseq
  %v815 = vshrl.u32 %v814, 7
  %v816 = vsub.s32 0, %v815
  %v817 = vrot.slane %v105, %v816
  %818 = vmatprep.subr.mxu0 0.0
  %819 = vmatpush1.msra.mxu0 %v85
  %820 = vmatprep.subr.mxu0 0.0
  %821 = vmatpush1.msra.mxu0 %v84
  %822 = vmatprep.subr.mxu0 0.0
  %823 = vmatpush1.msra.mxu0 %v83
  %824 = vmatprep.subr.mxu0 0.0
  %825 = vmatpush1.msra.mxu0 %v82
  %826 = vmatprep.subr.mxu0 0.0
  %827 = vmatpush1.msra.mxu0 %v81
  %828 = vmatprep.subr.mxu0 0.0
  %829 = vmatpush1.msra.mxu0 %v80
  %830 = vmatprep.subr.mxu0 0.0
  %831 = vmatpush1.msra.mxu0 %v79
  %832 = vmatprep.subr.mxu0 0.0
  %833 = vmatpush1.msra.mxu0 %v78
  %834 = vmatprep.subr.mxu0 0.0
  %835 = vmatpush1.msra.mxu0 %v77
  %836 = vmatprep.subr.mxu0 0.0
  %837 = vmatpush1.msra.mxu0 %v76
  %838 = vmatprep.subr.mxu0 0.0
  %839 = vmatpush1.msra.mxu0 %v75
  %840 = vmatprep.subr.mxu0 0.0
  %841 = vmatpush1.msra.mxu0 %v74
  %842 = vmatprep.subr.mxu0 0.0
  %843 = vmatpush1.msra.mxu0 %v73
  %844 = vmatprep.subr.mxu0 0.0
  %845 = vmatpush1.msra.mxu0 %v72
  %846 = vmatprep.subr.mxu0 0.0
  %847 = vmatpush1.msra.mxu0 %v71
  %848 = vmatprep.subr.mxu0 0.0
  %849 = vmatpush1.msra.mxu0 %v70
  %850 = vmatprep.subr.mxu0 0.0
  %851 = vmatpush2.msra.mxu0 0.0
  %852 = vmatprep.subr.mxu0 0.0
  %853 = vmatpush2.msra.mxu0 0.0
  %854 = vmatprep.subr.mxu0 0.0
  %855 = vmatpush2.msra.mxu0 0.0
  %856 = vmatprep.subr.mxu0 0.0
  %857 = vmatpush2.msra.mxu0 0.0
  %858 = vmatprep.subr.mxu0 0.0
  %859 = vmatpush2.msra.mxu0 0.0
  %860 = vmatprep.subr.mxu0 0.0
  %861 = vmatpush2.msra.mxu0 0.0
  %862 = vmatprep.subr.mxu0 0.0
  %863 = vmatpush2.msra.mxu0 0.0
  %864 = vmatprep.subr.mxu0 0.0
  %865 = vmatpush2.msra.mxu0 0.0
  %866 = vmatprep.subr.mxu0 0.0
  %867 = vmatpush2.msra.mxu0 0.0
  %868 = vmatprep.subr.mxu0 0.0
  %869 = vmatpush2.msra.mxu0 0.0
  %870 = vmatprep.subr.mxu0 0.0
  %871 = vmatpush2.msra.mxu0 0.0
  %872 = vmatprep.subr.mxu0 0.0
  %873 = vmatpush2.msra.mxu0 0.0
  %874 = vmatprep.subr.mxu0 0.0
  %875 = vmatpush2.msra.mxu0 0.0
  %876 = vmatprep.subr.mxu0 0.0
  %877 = vmatpush2.msra.mxu0 0.0
  %878 = vmatprep.subr.mxu0 0.0
  %879 = vmatpush2.msra.mxu0 0.0
  %880 = vmatprep.subr.mxu0 0.0
  %881 = vmatpush2.msra.mxu0 0.0
  %882 = vmatprep.mubr.f32.mxu0 0.0
  %883 = vmatmul.mubr.f32.gmra.mxu0 %v811
  %v884 = vpop.f32.mrf.mxu0
  %v885 = vadd.f32 %v817, %v884
  %v886 = vpop.f32.mrf.mxu0
  %887 = vdwg.mxu0
  %v888 = vmax.f32 %v885, 0.0
  %v889 = vlaneseq
  %v890 = vshrl.u32 %v889, 7
  %v891 = vsub.s32 0, %v890
  %v892 = vrot.slane %v106, %v891
  %893 = vmatprep.subr.mxu0 0.0
  %894 = vmatpush1.msra.mxu0 %v102
  %895 = vmatprep.subr.mxu0 0.0
  %896 = vmatpush1.msra.mxu0 %v101
  %897 = vmatprep.subr.mxu0 0.0
  %898 = vmatpush1.msra.mxu0 %v100
  %899 = vmatprep.subr.mxu0 0.0
  %900 = vmatpush1.msra.mxu0 %v99
  %901 = vmatprep.subr.mxu0 0.0
  %902 = vmatpush1.msra.mxu0 %v98
  %903 = vmatprep.subr.mxu0 0.0
  %904 = vmatpush1.msra.mxu0 %v97
  %905 = vmatprep.subr.mxu0 0.0
  %906 = vmatpush1.msra.mxu0 %v96
  %907 = vmatprep.subr.mxu0 0.0
  %908 = vmatpush1.msra.mxu0 %v95
  %909 = vmatprep.subr.mxu0 0.0
  %910 = vmatpush1.msra.mxu0 %v94
  %911 = vmatprep.subr.mxu0 0.0
  %912 = vmatpush1.msra.mxu0 %v93
  %913 = vmatprep.subr.mxu0 0.0
  %914 = vmatpush1.msra.mxu0 %v92
  %915 = vmatprep.subr.mxu0 0.0
  %916 = vmatpush1.msra.mxu0 %v91
  %917 = vmatprep.subr.mxu0 0.0
  %918 = vmatpush1.msra.mxu0 %v90
  %919 = vmatprep.subr.mxu0 0.0
  %920 = vmatpush1.msra.mxu0 %v89
  %921 = vmatprep.subr.mxu0 0.0
  %922 = vmatpush1.msra.mxu0 %v88
  %923 = vmatprep.subr.mxu0 0.0
  %924 = vmatpush1.msra.mxu0 %v87
  %925 = vmatprep.subr.mxu0 0.0
  %926 = vmatpush2.msra.mxu0 0.0
  %927 = vmatprep.subr.mxu0 0.0
  %928 = vmatpush2.msra.mxu0 0.0
  %929 = vmatprep.subr.mxu0 0.0
  %930 = vmatpush2.msra.mxu0 0.0
  %931 = vmatprep.subr.mxu0 0.0
  %932 = vmatpush2.msra.mxu0 0.0
  %933 = vmatprep.subr.mxu0 0.0
  %934 = vmatpush2.msra.mxu0 0.0
  %935 = vmatprep.subr.mxu0 0.0
  %936 = vmatpush2.msra.mxu0 0.0
  %937 = vmatprep.subr.mxu0 0.0
  %938 = vmatpush2.msra.mxu0 0.0
  %939 = vmatprep.subr.mxu0 0.0
  %940 = vmatpush2.msra.mxu0 0.0
  %941 = vmatprep.subr.mxu0 0.0
  %942 = vmatpush2.msra.mxu0 0.0
  %943 = vmatprep.subr.mxu0 0.0
  %944 = vmatpush2.msra.mxu0 0.0
  %945 = vmatprep.subr.mxu0 0.0
  %946 = vmatpush2.msra.mxu0 0.0
  %947 = vmatprep.subr.mxu0 0.0
  %948 = vmatpush2.msra.mxu0 0.0
  %949 = vmatprep.subr.mxu0 0.0
  %950 = vmatpush2.msra.mxu0 0.0
  %951 = vmatprep.subr.mxu0 0.0
  %952 = vmatpush2.msra.mxu0 0.0
  %953 = vmatprep.subr.mxu0 0.0
  %954 = vmatpush2.msra.mxu0 0.0
  %955 = vmatprep.subr.mxu0 0.0
  %956 = vmatpush2.msra.mxu0 0.0
  %957 = vmatprep.mubr.f32.mxu0 0.0
  %958 = vmatmul.mubr.f32.gmra.mxu0 %v888
  %v959 = vpop.f32.mrf.mxu0
  %v960 = vadd.f32 %v892, %v959
  %v961 = vpop.f32.mrf.mxu0
  %962 = vdwg.mxu0
  %963 = vst [vmem:[%s5] sm:$0xff] %v960
  // Predicated region
  $region22: #{molecule_gcn_forward.1} parent=0 // pred_check
    _
  $region23: #{molecule_gcn_forward.1} parent=0 // pred_check_branch
    %965 = sbr.rel (0) target = $region25
  $region24: #{molecule_gcn_forward.1} parent=0 // pred_region
    _
  $region25: #{molecule_gcn_forward.1} parent=0 // pred_fallthru
    _
  // Predicated region
  $region26: #{molecule_gcn_forward.1} parent=0 // pred_check
    _
  $region27: #{molecule_gcn_forward.1} parent=0 // pred_check_branch
    %967 = sbr.rel (0) target = $region29
  $region28: #{molecule_gcn_forward.1} parent=0 // pred_region
    _
  $region29: #{molecule_gcn_forward.1} parent=0 // pred_fallthru
    _

</llo_original>
